<compile_context>
chip_gen: v5e
topology: v5e:2x2
jax: 0.10.0
libtpu: 0.0.40
codegen_flags: <defaults>
</compile_context>

<pallas_src>
import math

import jax
import jax.numpy as jnp
from jax.experimental import pallas as pl
from jax.experimental.pallas import tpu as pltpu

# -------------------- problem sizes (small, synthetic) --------------------
B = 2          # batch
S = 8          # sequence length
D = 32         # in_channels
H = 4          # num_head
DH = D // H    # d_model per head
BS = B * S
HB = H * B     # flat (head, batch) axis
LN_EPS = 1e-5


# -------------------------- Pallas kernel body ----------------------------
def mha_kernel(x_ref, wqkv_ref, wo_ref, p_ref, o_ref):
    # Single invocation: all weights + activations (~15 KiB) sit in VMEM.
    x = x_ref[...].astype(jnp.float32)                                  # (BS, D)

    # Fused Q|K|V projection: one (BS,D)@(D,3D) MXU matmul + packed bias row.
    qkv = jnp.dot(x, wqkv_ref[...],
                  preferred_element_type=jnp.float32) + p_ref[0:1, 0:3 * D]   # (BS, 3D)

    scale = 1.0 / math.sqrt(DH)

    # Head-major relayout done ONCE up-front (per-head lane slices + one leading-axis
    # concat each) so the attention core below is fully batched over n = h*B + b.
    def split_heads(lane_off):
        return jnp.concatenate(
            [qkv[:, lane_off + h * DH: lane_off + (h + 1) * DH].reshape(B, S, DH)
             for h in range(H)], axis=0)                                 # (H*B, S, DH)

    q = split_heads(0) * scale        # fold 1/sqrt(DH) into q once (VPU-cheap)
    k = split_heads(D)
    v = split_heads(2 * D)

    # ONE batched score matmul over all (head, batch) pairs.
    s = jnp.einsum("nqd,nkd->nqk", q, k,
                   preferred_element_type=jnp.float32)                   # (HB, S, S)

    # ONE (S,S) causal mask, broadcast over the flat (head, batch) axis.
    row = jax.lax.broadcasted_iota(jnp.int32, (1, S, S), 1)
    col = jax.lax.broadcasted_iota(jnp.int32, (1, S, S), 2)
    s = jnp.where(col <= row, s, -1e30)

    # ONE softmax chain; exact division (no approx reciprocal) to match reference.
    m = jnp.max(s, axis=-1, keepdims=True)
    e = jnp.exp(s - m)
    p = e / jnp.sum(e, axis=-1, keepdims=True)

    # ONE batched attention-value matmul.
    av = jnp.einsum("nqk,nkd->nqd", p, v,
                    preferred_element_type=jnp.float32)                  # (HB, S, DH)

    # Fold heads back to (BS, D) with one lane-concat (XLU relayout), then a single
    # (BS,D)@(D,D) output projection (replaces 4 accumulated per-head dots).
    attn = jnp.concatenate(
        [av[h * B:(h + 1) * B].reshape(BS, DH) for h in range(H)], axis=-1)    # (BS, D)
    proj = jnp.dot(attn, wo_ref[...], preferred_element_type=jnp.float32)      # (BS, D)

    bo = p_ref[1:2, 0:D]
    gamma = p_ref[2:3, 0:D]
    beta = p_ref[3:4, 0:D]

    # Output-projection bias + residual, then LayerNorm over channels.
    r = proj + bo + x
    mean = jnp.mean(r, axis=-1, keepdims=True)
    var = jnp.mean((r - mean) ** 2, axis=-1, keepdims=True)
    out = (r - mean) * jax.lax.rsqrt(var + LN_EPS) * gamma + beta
    o_ref[...] = out.astype(o_ref.dtype)


# ------------------------------ wrapper ------------------------------------
def masked_mha(x, wq, wk, wv, wo, bq, bk, bv, bo, gamma, beta):
    # Wrapper-side packing (pure layout plumbing):
    #   x                          -> (B*S, D) slab
    #   WQ|WK|WV                   -> (D, 3D)
    #   bq|bk|bv, bo, gamma, beta  -> one tile-aligned (8, 128) f32 block
    x2 = x.reshape(BS, D)
    wqkv = jnp.concatenate([wq, wk, wv], axis=1)                         # (D, 3D)

    params = jnp.zeros((8, 128), jnp.float32)
    params = params.at[0, 0:3 * D].set(jnp.concatenate([bq, bk, bv]))
    params = params.at[1, 0:D].set(bo)
    params = params.at[2, 0:D].set(gamma)
    params = params.at[3, 0:D].set(beta)

    out2 = pl.pallas_call(
        mha_kernel,
        out_shape=jax.ShapeDtypeStruct((BS, D), x.dtype),
        grid=(1,),
        in_specs=[
            pl.BlockSpec((BS, D), lambda i: (0, 0)),        # x slab
            pl.BlockSpec((D, 3 * D), lambda i: (0, 0)),     # packed WQ|WK|WV
            pl.BlockSpec((D, D), lambda i: (0, 0)),         # WO
            pl.BlockSpec((8, 128), lambda i: (0, 0)),       # packed biases + LN params
        ],
        out_specs=pl.BlockSpec((BS, D), lambda i: (0, 0)),
        compiler_params=pltpu.CompilerParams(
            dimension_semantics=("arbitrary",)),
    )(x2, wqkv, wo, params)
    return out2.reshape(B, S, D)


# -------------------------- pure-JAX reference ------------------------------
def reference(x, wq, wk, wv, wo, bq, bk, bv, bo, gamma, beta):
    q = x @ wq + bq
    k = x @ wk + bk
    v = x @ wv + bv
    q = q.reshape(B, S, H, DH).transpose(0, 2, 1, 3)
    k = k.reshape(B, S, H, DH).transpose(0, 2, 1, 3)
    v = v.reshape(B, S, H, DH).transpose(0, 2, 1, 3)
    s = jnp.einsum("bhqd,bhkd->bhqk", q, k) / math.sqrt(DH)
    mask = jnp.tril(jnp.ones((S, S), bool))
    s = jnp.where(mask, s, -jnp.inf)
    p = jax.nn.softmax(s, axis=-1)
    a = jnp.einsum("bhqk,bhkd->bhqd", p, v)
    a = a.transpose(0, 2, 1, 3).reshape(B, S, D)
    r = a @ wo + bo + x
    mean = r.mean(-1, keepdims=True)
    var = ((r - mean) ** 2).mean(-1, keepdims=True)
    return (r - mean) / jnp.sqrt(var + LN_EPS) * gamma + beta


# ------------------------------- main ---------------------------------------
if __name__ == "__main__":
    key = jax.random.PRNGKey(0)
    ks = jax.random.split(key, 12)

    x = jax.random.normal(ks[0], (B, S, D), jnp.float32)

    init = lambda k, shape: (jax.random.normal(k, shape, jnp.float32)
                             / math.sqrt(shape[0] if len(shape) == 2 else 1.0))
    wq = init(ks[1], (D, D));  bq = init(ks[2], (D,)) * 0.1
    wk = init(ks[3], (D, D));  bk = init(ks[4], (D,)) * 0.1
    wv = init(ks[5], (D, D));  bv = init(ks[6], (D,)) * 0.1
    wo = init(ks[7], (D, D));  bo = init(ks[8], (D,)) * 0.1
    gamma = jnp.ones((D,), jnp.float32)
    beta = jnp.zeros((D,), jnp.float32)

    out = masked_mha(x, wq, wk, wv, wo, bq, bk, bv, bo, gamma, beta)
    out = jax.block_until_ready(out)

    ref = reference(x, wq, wk, wv, wo, bq, bk, bv, bo, gamma, beta)
    assert out.shape == (B, S, D)
    # Exact softmax division -> tight tolerance; real bugs (mask/heads/residual/LN)
    # would be O(1) off.
    assert jnp.allclose(out, ref, atol=1e-4, rtol=1e-4), "mismatch vs reference"

    print("KERNEL_OK")
</pallas_src>

<mosaic_0001>
module attributes {stable_mosaic.version = 11 : i64} {
  func.func @mha_kernel(%arg0: i32, %arg1: memref<16x32xf32, #tpu.memory_space<vmem>>, %arg2: memref<32x96xf32, #tpu.memory_space<vmem>>, %arg3: memref<32x32xf32, #tpu.memory_space<vmem>>, %arg4: memref<8x128xf32, #tpu.memory_space<vmem>>, %arg5: memref<16x32xf32, #tpu.memory_space<vmem>>) attributes {dimension_semantics = [#tpu.dimension_semantics<arbitrary>], iteration_bounds = array<i64: 1>, scalar_prefetch = 0 : i64, scratch_operands = 0 : i64, tpu.core_type = #tpu.core_type<tc>, window_params = [{pipeline_mode = #tpu.pipeline_mode<synchronous>, transform_indices = @transform_0, window_bounds = array<i64: 16, 32>}, {pipeline_mode = #tpu.pipeline_mode<synchronous>, transform_indices = @transform_1, window_bounds = array<i64: 32, 96>}, {pipeline_mode = #tpu.pipeline_mode<synchronous>, transform_indices = @transform_2, window_bounds = array<i64: 32, 32>}, {pipeline_mode = #tpu.pipeline_mode<synchronous>, transform_indices = @transform_3, window_bounds = array<i64: 8, 128>}, {pipeline_mode = #tpu.pipeline_mode<synchronous>, transform_indices = @transform_4, window_bounds = array<i64: 16, 32>}]} {
    %c0 = arith.constant 0 : index
    %c0_0 = arith.constant 0 : index
    %0 = vector.load %arg1[%c0, %c0_0] : memref<16x32xf32, #tpu.memory_space<vmem>>, vector<16x32xf32>
    %c0_1 = arith.constant 0 : index
    %c0_2 = arith.constant 0 : index
    %1 = vector.load %arg2[%c0_1, %c0_2] : memref<32x96xf32, #tpu.memory_space<vmem>>, vector<32x96xf32>
    %cst = arith.constant dense<0.000000e+00> : vector<16x96xf32>
    %2 = tpu.matmul %0, %1, %cst {dimension_numbers = #tpu.dot_dimension_numbers<[1], [0], [0], [1], [0, 0, 1, 1], [], []>} : vector<16x32xf32>, vector<32x96xf32>, vector<16x96xf32> -> vector<16x96xf32>
    %c0_3 = arith.constant 0 : index
    %c0_4 = arith.constant 0 : index
    %3 = vector.load %arg4[%c0_3, %c0_4] : memref<8x128xf32, #tpu.memory_space<vmem>>, vector<1x96xf32>
    %4 = vector.broadcast %3 : vector<1x96xf32> to vector<16x96xf32>
    %5 = arith.addf %2, %4 : vector<16x96xf32>
    %6 = vector.extract_strided_slice %5 {offsets = [0, 0], sizes = [16, 8], strides = [1, 1]} : vector<16x96xf32> to vector<16x8xf32>
    %7 = vector.shape_cast %6 : vector<16x8xf32> to vector<2x8x8xf32>
    %8 = vector.extract_strided_slice %5 {offsets = [0, 8], sizes = [16, 8], strides = [1, 1]} : vector<16x96xf32> to vector<16x8xf32>
    %9 = vector.shape_cast %8 : vector<16x8xf32> to vector<2x8x8xf32>
    %10 = vector.extract_strided_slice %5 {offsets = [0, 16], sizes = [16, 8], strides = [1, 1]} : vector<16x96xf32> to vector<16x8xf32>
    %11 = vector.shape_cast %10 : vector<16x8xf32> to vector<2x8x8xf32>
    %12 = vector.extract_strided_slice %5 {offsets = [0, 24], sizes = [16, 8], strides = [1, 1]} : vector<16x96xf32> to vector<16x8xf32>
    %13 = vector.shape_cast %12 : vector<16x8xf32> to vector<2x8x8xf32>
    %14 = tpu.concatenate %7, %9, %11, %13 in 0 : vector<2x8x8xf32>, vector<2x8x8xf32>, vector<2x8x8xf32>, vector<2x8x8xf32> -> vector<8x8x8xf32>
    %cst_5 = arith.constant 0.353553385 : f32
    %15 = vector.broadcast %cst_5 : f32 to vector<8x8x8xf32>
    %16 = arith.mulf %14, %15 : vector<8x8x8xf32>
    %17 = vector.extract_strided_slice %5 {offsets = [0, 32], sizes = [16, 8], strides = [1, 1]} : vector<16x96xf32> to vector<16x8xf32>
    %18 = vector.shape_cast %17 : vector<16x8xf32> to vector<2x8x8xf32>
    %19 = vector.extract_strided_slice %5 {offsets = [0, 40], sizes = [16, 8], strides = [1, 1]} : vector<16x96xf32> to vector<16x8xf32>
    %20 = vector.shape_cast %19 : vector<16x8xf32> to vector<2x8x8xf32>
    %21 = vector.extract_strided_slice %5 {offsets = [0, 48], sizes = [16, 8], strides = [1, 1]} : vector<16x96xf32> to vector<16x8xf32>
    %22 = vector.shape_cast %21 : vector<16x8xf32> to vector<2x8x8xf32>
    %23 = vector.extract_strided_slice %5 {offsets = [0, 56], sizes = [16, 8], strides = [1, 1]} : vector<16x96xf32> to vector<16x8xf32>
    %24 = vector.shape_cast %23 : vector<16x8xf32> to vector<2x8x8xf32>
    %25 = tpu.concatenate %18, %20, %22, %24 in 0 : vector<2x8x8xf32>, vector<2x8x8xf32>, vector<2x8x8xf32>, vector<2x8x8xf32> -> vector<8x8x8xf32>
    %26 = vector.extract_strided_slice %5 {offsets = [0, 64], sizes = [16, 8], strides = [1, 1]} : vector<16x96xf32> to vector<16x8xf32>
    %27 = vector.shape_cast %26 : vector<16x8xf32> to vector<2x8x8xf32>
    %28 = vector.extract_strided_slice %5 {offsets = [0, 72], sizes = [16, 8], strides = [1, 1]} : vector<16x96xf32> to vector<16x8xf32>
    %29 = vector.shape_cast %28 : vector<16x8xf32> to vector<2x8x8xf32>
    %30 = vector.extract_strided_slice %5 {offsets = [0, 80], sizes = [16, 8], strides = [1, 1]} : vector<16x96xf32> to vector<16x8xf32>
    %31 = vector.shape_cast %30 : vector<16x8xf32> to vector<2x8x8xf32>
    %32 = vector.extract_strided_slice %5 {offsets = [0, 88], sizes = [16, 8], strides = [1, 1]} : vector<16x96xf32> to vector<16x8xf32>
    %33 = vector.shape_cast %32 : vector<16x8xf32> to vector<2x8x8xf32>
    %34 = tpu.concatenate %27, %29, %31, %33 in 0 : vector<2x8x8xf32>, vector<2x8x8xf32>, vector<2x8x8xf32>, vector<2x8x8xf32> -> vector<8x8x8xf32>
    "tpu.trace_start"() <{level = 10 : i32, message = "nqd,nkd->nqk"}> : () -> ()
    %cst_6 = arith.constant dense<0.000000e+00> : vector<8x8x8xf32>
    %35 = tpu.matmul %16, %25, %cst_6 {dimension_numbers = #tpu.dot_dimension_numbers<[2], [2], [1], [1], [0, 0, 0, 1, 1, 1], [0], [0]>} : vector<8x8x8xf32>, vector<8x8x8xf32>, vector<8x8x8xf32> -> vector<8x8x8xf32>
    "tpu.trace_stop"() : () -> ()
    %36 = tpu.iota {dimensions = array<i32: 1>} : vector<1x8x8xi32>
    %37 = tpu.iota {dimensions = array<i32: 2>} : vector<1x8x8xi32>
    %38 = arith.cmpi sle, %37, %36 : vector<1x8x8xi32>
    %cst_7 = arith.constant -1.000000e+30 : f32
    %39 = vector.shape_cast %38 : vector<1x8x8xi1> to vector<1x8x8xi1>
    %40 = vector.broadcast %39 : vector<1x8x8xi1> to vector<8x8x8xi1>
    %41 = vector.broadcast %cst_7 : f32 to vector<8x8x8xf32>
    %42 = arith.select %40, %35, %41 : vector<8x8x8xi1>, vector<8x8x8xf32>
    %cst_8 = arith.constant dense<0xFF800000> : vector<8x8xf32>
    %43 = vector.multi_reduction <maximumf>, %42, %cst_8 [2] : vector<8x8x8xf32> to vector<8x8xf32>
    %44 = vector.shape_cast %43 : vector<8x8xf32> to vector<8x8x1xf32>
    %45 = vector.broadcast %44 : vector<8x8x1xf32> to vector<8x8x8xf32>
    %46 = arith.subf %42, %45 : vector<8x8x8xf32>
    %47 = math.exp %46 : vector<8x8x8xf32>
    %cst_9 = arith.constant dense<0.000000e+00> : vector<8x8xf32>
    %48 = vector.multi_reduction <add>, %47, %cst_9 [2] : vector<8x8x8xf32> to vector<8x8xf32>
    %49 = vector.shape_cast %48 : vector<8x8xf32> to vector<8x8x1xf32>
    %50 = vector.broadcast %49 : vector<8x8x1xf32> to vector<8x8x8xf32>
    %51 = arith.divf %47, %50 : vector<8x8x8xf32>
    "tpu.trace_start"() <{level = 10 : i32, message = "nqk,nkd->nqd"}> : () -> ()
    %cst_10 = arith.constant dense<0.000000e+00> : vector<8x8x8xf32>
    %52 = tpu.matmul %51, %34, %cst_10 {dimension_numbers = #tpu.dot_dimension_numbers<[2], [1], [1], [2], [0, 0, 0, 1, 1, 2], [0], [0]>} : vector<8x8x8xf32>, vector<8x8x8xf32>, vector<8x8x8xf32> -> vector<8x8x8xf32>
    "tpu.trace_stop"() : () -> ()
    %53 = vector.extract_strided_slice %52 {offsets = [0, 0, 0], sizes = [2, 8, 8], strides = [1, 1, 1]} : vector<8x8x8xf32> to vector<2x8x8xf32>
    %54 = vector.shape_cast %53 : vector<2x8x8xf32> to vector<16x8xf32>
    %55 = vector.extract_strided_slice %52 {offsets = [2, 0, 0], sizes = [2, 8, 8], strides = [1, 1, 1]} : vector<8x8x8xf32> to vector<2x8x8xf32>
    %56 = vector.shape_cast %55 : vector<2x8x8xf32> to vector<16x8xf32>
    %57 = vector.extract_strided_slice %52 {offsets = [4, 0, 0], sizes = [2, 8, 8], strides = [1, 1, 1]} : vector<8x8x8xf32> to vector<2x8x8xf32>
    %58 = vector.shape_cast %57 : vector<2x8x8xf32> to vector<16x8xf32>
    %59 = vector.extract_strided_slice %52 {offsets = [6, 0, 0], sizes = [2, 8, 8], strides = [1, 1, 1]} : vector<8x8x8xf32> to vector<2x8x8xf32>
    %60 = vector.shape_cast %59 : vector<2x8x8xf32> to vector<16x8xf32>
    %61 = tpu.concatenate %54, %56, %58, %60 in 1 : vector<16x8xf32>, vector<16x8xf32>, vector<16x8xf32>, vector<16x8xf32> -> vector<16x32xf32>
    %c0_11 = arith.constant 0 : index
    %c0_12 = arith.constant 0 : index
    %62 = vector.load %arg3[%c0_11, %c0_12] : memref<32x32xf32, #tpu.memory_space<vmem>>, vector<32x32xf32>
    %cst_13 = arith.constant dense<0.000000e+00> : vector<16x32xf32>
    %63 = tpu.matmul %61, %62, %cst_13 {dimension_numbers = #tpu.dot_dimension_numbers<[1], [0], [0], [1], [0, 0, 1, 1], [], []>} : vector<16x32xf32>, vector<32x32xf32>, vector<16x32xf32> -> vector<16x32xf32>
    %c1 = arith.constant 1 : index
    %c0_14 = arith.constant 0 : index
    %64 = vector.load %arg4[%c1, %c0_14] : memref<8x128xf32, #tpu.memory_space<vmem>>, vector<1x32xf32>
    %c2 = arith.constant 2 : index
    %c0_15 = arith.constant 0 : index
    %65 = vector.load %arg4[%c2, %c0_15] : memref<8x128xf32, #tpu.memory_space<vmem>>, vector<1x32xf32>
    %c3 = arith.constant 3 : index
    %c0_16 = arith.constant 0 : index
    %66 = vector.load %arg4[%c3, %c0_16] : memref<8x128xf32, #tpu.memory_space<vmem>>, vector<1x32xf32>
    %67 = vector.broadcast %64 : vector<1x32xf32> to vector<16x32xf32>
    %68 = arith.addf %63, %67 : vector<16x32xf32>
    %69 = arith.addf %68, %0 : vector<16x32xf32>
    %cst_17 = arith.constant dense<0.000000e+00> : vector<16xf32>
    %70 = vector.multi_reduction <add>, %69, %cst_17 [1] : vector<16x32xf32> to vector<16xf32>
    %71 = vector.shape_cast %70 : vector<16xf32> to vector<16x1xf32>
    %cst_18 = arith.constant 3.200000e+01 : f32
    %72 = vector.broadcast %cst_18 : f32 to vector<16x1xf32>
    %73 = arith.divf %71, %72 : vector<16x1xf32>
    %74 = vector.broadcast %73 : vector<16x1xf32> to vector<16x32xf32>
    %75 = arith.subf %69, %74 : vector<16x32xf32>
    %76 = arith.mulf %75, %75 : vector<16x32xf32>
    %cst_19 = arith.constant dense<0.000000e+00> : vector<16xf32>
    %77 = vector.multi_reduction <add>, %76, %cst_19 [1] : vector<16x32xf32> to vector<16xf32>
    %78 = vector.shape_cast %77 : vector<16xf32> to vector<16x1xf32>
    %cst_20 = arith.constant 3.200000e+01 : f32
    %79 = vector.broadcast %cst_20 : f32 to vector<16x1xf32>
    %80 = arith.divf %78, %79 : vector<16x1xf32>
    %81 = vector.broadcast %73 : vector<16x1xf32> to vector<16x32xf32>
    %82 = arith.subf %69, %81 : vector<16x32xf32>
    %cst_21 = arith.constant 9.99999974E-6 : f32
    %83 = vector.broadcast %cst_21 : f32 to vector<16x1xf32>
    %84 = arith.addf %80, %83 : vector<16x1xf32>
    %85 = math.rsqrt %84 : vector<16x1xf32>
    %86 = vector.broadcast %85 : vector<16x1xf32> to vector<16x32xf32>
    %87 = arith.mulf %82, %86 : vector<16x32xf32>
    %88 = vector.broadcast %65 : vector<1x32xf32> to vector<16x32xf32>
    %89 = arith.mulf %87, %88 : vector<16x32xf32>
    %90 = vector.broadcast %66 : vector<1x32xf32> to vector<16x32xf32>
    %91 = arith.addf %89, %90 : vector<16x32xf32>
    %c0_22 = arith.constant 0 : index
    %c0_23 = arith.constant 0 : index
    %92 = vector.load %arg5[%c0_22, %c0_23] : memref<16x32xf32, #tpu.memory_space<vmem>>, vector<16x32xf32>
    tpu.vector_store %arg5[%c0_22, %c0_23], %91 {strides = array<i32>} : memref<16x32xf32, #tpu.memory_space<vmem>>, vector<16x32xf32>,
    return
  }
  func.func @transform_0(%arg0: i32) -> (i32, i32) {
    %c0_i32 = arith.constant 0 : i32
    %c0_i32_0 = arith.constant 0 : i32
    %c0_i32_1 = arith.constant 0 : i32
    return %c0_i32, %c0_i32_0 : i32, i32
  }
  func.func @transform_1(%arg0: i32) -> (i32, i32) {
    %c0_i32 = arith.constant 0 : i32
    %c0_i32_0 = arith.constant 0 : i32
    %c0_i32_1 = arith.constant 0 : i32
    return %c0_i32, %c0_i32_0 : i32, i32
  }
  func.func @transform_2(%arg0: i32) -> (i32, i32) {
    %c0_i32 = arith.constant 0 : i32
    %c0_i32_0 = arith.constant 0 : i32
    %c0_i32_1 = arith.constant 0 : i32
    return %c0_i32, %c0_i32_0 : i32, i32
  }
  func.func @transform_3(%arg0: i32) -> (i32, i32) {
    %c0_i32 = arith.constant 0 : i32
    %c0_i32_0 = arith.constant 0 : i32
    %c0_i32_1 = arith.constant 0 : i32
    return %c0_i32, %c0_i32_0 : i32, i32
  }
  func.func @transform_4(%arg0: i32) -> (i32, i32) {
    %c0_i32 = arith.constant 0 : i32
    %c0_i32_0 = arith.constant 0 : i32
    %c0_i32_1 = arith.constant 0 : i32
    return %c0_i32, %c0_i32_0 : i32, i32
  }
}

</mosaic_0001>

<llo_original>
// kernel: tpu_custom_call.1
$region0: #{tpu_custom_call.1}
  #allocation0 [shape = 'u32[]', space=smem, size = 0x4, offset = 0x4, fixed_abs, tag = 'smem constant byte address 0x4 - core index']
  #allocation1 [shape = 'u32[72,128]{1,0:T(1,128)}', space=vmem, size = 0x9000, scoped, tag = 'internal scratch']
  %s0 = inlined_call_operand.hbm [shape: f32[16,32], index: 0, kind: input, shape index: {}]
  %s1 = inlined_call_operand.hbm [shape: f32[32,96], index: 1, kind: input, shape index: {}]
  %s2 = inlined_call_operand.hbm [shape: f32[32,32], index: 2, kind: input, shape index: {}]
  %s3 = inlined_call_operand.hbm [shape: f32[8,128], index: 3, kind: input, shape index: {}]
  %s4 = inlined_call_operand.hbm [shape: f32[16,32], index: 4, kind: output, shape index: {}]
  %s5 = sld [smem:[#allocation0]]
  $region42: #{tpu_custom_call.1} parent=0
    _
  %s7 = ssub.s32 1, %s5
  %s8 = scalar_select 0, %s7, %s5
  $region1: #{tpu_custom_call.1} parent=0
    #allocation2 [shape = 'u8[8192]{0}', space=vmem, size = 0x2000, scoped, tag = 'input window, operand 0, single buffered']
    #allocation3 [shape = 's32[1]{0}', space=sflag, size = 0x4, scoped, tag = 'scoped memory for tpu_custom_call.1']
    #allocation4 [shape = 's32[1]{0}', space=sflag, size = 0x4, scoped, tag = 'scoped memory for tpu_custom_call.1']
    #allocation5 [shape = 'u8[16384]{0}', space=vmem, size = 0x4000, scoped, tag = 'input window, operand 1, single buffered']
    #allocation6 [shape = 's32[1]{0}', space=sflag, size = 0x4, scoped, tag = 'scoped memory for tpu_custom_call.1']
    #allocation7 [shape = 'u8[16384]{0}', space=vmem, size = 0x4000, scoped, tag = 'input window, operand 2, single buffered']
    #allocation8 [shape = 'u8[4096]{0}', space=vmem, size = 0x1000, scoped, tag = 'input window, operand 3, single buffered']
    #allocation9 [shape = 's32[1]{0}', space=sflag, size = 0x4, scoped, tag = 'scoped memory for tpu_custom_call.1']
    #allocation10 [shape = 'u8[8192]{0}', space=vmem, size = 0x2000, scoped, tag = 'output window, operand 0, single buffered']
    %9 = vsyncpa [#allocation3], 0
    %10 = vsyncpa [#allocation6], 0
    %11 = vsyncpa [#allocation9], 0
    %12 = vsyncpa [#allocation4], 0
    // Predicated region
    $region2: #{tpu_custom_call.1} parent=1 // pred_check
      _
    $region3: #{tpu_custom_call.1} parent=1 // pred_check_branch
      %14 = sbr.rel (0) target = $region5
    $region4: #{tpu_custom_call.1} parent=1 // pred_region
      %16 = vsyncadd [#allocation3], 0
      %s17 = sshll.u32 %s0, 4
      %s18 = int_to_ptr.hbm [resolvable:$true] %s17
      %s19 = sshll.u32 [#allocation2], 4
      %s20 = int_to_ptr.vmem [resolvable:$true] %s19
      %25 = dma.hbm_to_vmem [thread:$0]  %s18, 256, %s20, [#allocation3], 128, 128, 8
    $region5: #{tpu_custom_call.1} parent=1 // pred_fallthru
      _
    // Predicated region
    $region6: #{tpu_custom_call.1} parent=1 // pred_check
      _
    $region7: #{tpu_custom_call.1} parent=1 // pred_check_branch
      %27 = sbr.rel (0) target = $region9
    $region8: #{tpu_custom_call.1} parent=1 // pred_region
      %29 = vsyncadd [#allocation6], 0
      %s30 = sshll.u32 %s1, 4
      %s31 = int_to_ptr.hbm [resolvable:$true] %s30
      %s32 = sshll.u32 [#allocation5], 4
      %s33 = int_to_ptr.vmem [resolvable:$true] %s32
      %38 = dma.hbm_to_vmem [thread:$0]  %s31, 512, %s33, [#allocation6], 128, 128, 8
    $region9: #{tpu_custom_call.1} parent=1 // pred_fallthru
      _
    // Predicated region
    $region10: #{tpu_custom_call.1} parent=1 // pred_check
      _
    $region11: #{tpu_custom_call.1} parent=1 // pred_check_branch
      %40 = sbr.rel (0) target = $region13
    $region12: #{tpu_custom_call.1} parent=1 // pred_region
      %42 = vsyncadd [#allocation6], 0
      %s43 = sshll.u32 %s2, 4
      %s44 = int_to_ptr.hbm [resolvable:$true] %s43
      %s45 = sshll.u32 [#allocation7], 4
      %s46 = int_to_ptr.vmem [resolvable:$true] %s45
      %51 = dma.hbm_to_vmem [thread:$0]  %s44, 512, %s46, [#allocation6], 128, 128, 8
    $region13: #{tpu_custom_call.1} parent=1 // pred_fallthru
      _
    // Predicated region
    $region14: #{tpu_custom_call.1} parent=1 // pred_check
      _
    $region15: #{tpu_custom_call.1} parent=1 // pred_check_branch
      %53 = sbr.rel (0) target = $region17
    $region16: #{tpu_custom_call.1} parent=1 // pred_region
      %55 = vsyncadd [#allocation9], 0
      %s57 = sshll.u32 %s3, 4
      %s58 = int_to_ptr.hbm [resolvable:$true] %s57
      %s59 = sshll.u32 [#allocation8], 4
      %s60 = int_to_ptr.vmem [resolvable:$true] %s59
      %62 = dma.hbm_to_vmem [thread:$0]  %s58, 128, %s60, [#allocation9]
    $region17: #{tpu_custom_call.1} parent=1 // pred_fallthru
      _
    // Predicated region
    $region18: #{tpu_custom_call.1} parent=1 // pred_check
      _
    $region19: #{tpu_custom_call.1} parent=1 // pred_check_branch
      %64 = sbr.rel (0) target = $region21
    $region20: #{tpu_custom_call.1} parent=1 // pred_region
      %66 = dma.done [#allocation3], 256
    $region21: #{tpu_custom_call.1} parent=1 // pred_fallthru
      _
    // Predicated region
    $region22: #{tpu_custom_call.1} parent=1 // pred_check
      _
    $region23: #{tpu_custom_call.1} parent=1 // pred_check_branch
      %68 = sbr.rel (0) target = $region25
    $region24: #{tpu_custom_call.1} parent=1 // pred_region
      %70 = dma.done [#allocation6], 512
    $region25: #{tpu_custom_call.1} parent=1 // pred_fallthru
      _
    // Predicated region
    $region26: #{tpu_custom_call.1} parent=1 // pred_check
      _
    $region27: #{tpu_custom_call.1} parent=1 // pred_check_branch
      %72 = sbr.rel (0) target = $region29
    $region28: #{tpu_custom_call.1} parent=1 // pred_region
      %74 = dma.done [#allocation6], 512
    $region29: #{tpu_custom_call.1} parent=1 // pred_fallthru
      _
    // Predicated region
    $region30: #{tpu_custom_call.1} parent=1 // pred_check
      _
    $region31: #{tpu_custom_call.1} parent=1 // pred_check_branch
      %76 = sbr.rel (0) target = $region33
    $region32: #{tpu_custom_call.1} parent=1 // pred_region
      %78 = dma.done [#allocation9], 128
    $region33: #{tpu_custom_call.1} parent=1 // pred_fallthru
      _
    %v79 = vld [vmem:[#allocation2] sm:$0xff]
    %v80 = vld [vmem:[#allocation2 + $0x8] sm:$0xff]
    %v81 = vld [vmem:[#allocation5] sm:$0xff]
    %v82 = vld [vmem:[#allocation5 + $0x8] sm:$0xff]
    %v83 = vld [vmem:[#allocation5 + $0x10] sm:$0xff]
    %v84 = vld [vmem:[#allocation5 + $0x18] sm:$0xff]
    %v85 = vld [vmem:[#allocation8] sm:$0x1]
    %v86 = vperm.slane %v85, 0
    %vm87 = vcmask 261120
    %v89 = vsel %vm87, %v79, 0
    %v92 = vsel %vm87, %v80, 0
    %94 = vmatpush.msra.mxu0 0.0
    %95 = vmatpush.msra.mxu0 0.0
    %96 = vmatpush.msra.mxu0 0.0
    %97 = vmatpush.msra.mxu0 0.0
    %98 = vmatpush.msra.mxu0 0.0
    %99 = vmatpush.msra.mxu0 0.0
    %100 = vmatpush.msra.mxu0 0.0
    %101 = vmatpush.msra.mxu0 0.0
    %102 = vmatpush.msra.mxu0 0.0
    %103 = vmatpush.msra.mxu0 0.0
    %104 = vmatpush.msra.mxu0 0.0
    %105 = vmatpush.msra.mxu0 0.0
    %106 = vmatpush.msra.mxu0 %v84
    %107 = vmatpush.msra.mxu0 %v83
    %108 = vmatpush.msra.mxu0 %v82
    %109 = vmatpush.msra.mxu0 %v81
    %110 = vmatmul.f32.gmra.mxu0 %v89
    %v111 = vpop.f32.mrf.mxu0
    %v112 = vadd.f32 %v86, %v111
    %113 = vmatmul.f32.gmra.mxu0 %v92
    %v114 = vpop.f32.mrf.mxu0
    %v115 = vadd.f32 %v86, %v114
    %116 = vdwg.mxu0
    %119 = vrot.lane.b32.xlu0 %v112, 120
    %v120 = vpop.permute.xlu0 %119
    %121 = vrot.lane.b32.xlu0 %v115, 120
    %v122 = vpop.permute.xlu0 %121
    %125 = vrot.lane.b32.xlu0 %v112, 112
    %v126 = vpop.permute.xlu0 %125
    %127 = vrot.lane.b32.xlu0 %v115, 112
    %v128 = vpop.permute.xlu0 %127
    %131 = vrot.lane.b32.xlu0 %v112, 104
    %v132 = vpop.permute.xlu0 %131
    %133 = vrot.lane.b32.xlu0 %v115, 104
    %v134 = vpop.permute.xlu0 %133
    %v137 = vmul.f32 %v112, 0.35355338
    %v138 = vmul.f32 %v115, 0.35355338
    %v139 = vmul.f32 %v120, 0.35355338
    %v140 = vmul.f32 %v122, 0.35355338
    %v141 = vmul.f32 %v126, 0.35355338
    %v142 = vmul.f32 %v128, 0.35355338
    %v143 = vmul.f32 %v132, 0.35355338
    %v144 = vmul.f32 %v134, 0.35355338
    %145 = vrot.lane.b32.xlu0 %v112, 96
    %v146 = vpop.permute.xlu0 %145
    %vm147 = vcmask 64512
    %v149 = vsel %vm147, %v137, 0
    %v151 = vsel %vm147, %v146, 0
    %153 = vmatpush.xpose.msra.mxu0 0.0
    %154 = vmatpush.xpose.msra.mxu0 0.0
    %155 = vmatpush.xpose.msra.mxu0 0.0
    %156 = vmatpush.xpose.msra.mxu0 0.0
    %157 = vmatpush.xpose.msra.mxu0 0.0
    %158 = vmatpush.xpose.msra.mxu0 0.0
    %159 = vmatpush.xpose.msra.mxu0 0.0
    %160 = vmatpush.xpose.msra.mxu0 0.0
    %161 = vmatpush.xpose.msra.mxu0 0.0
    %162 = vmatpush.xpose.msra.mxu0 0.0
    %163 = vmatpush.xpose.msra.mxu0 0.0
    %164 = vmatpush.xpose.msra.mxu0 0.0
    %165 = vmatpush.xpose.msra.mxu0 0.0
    %166 = vmatpush.xpose.msra.mxu0 0.0
    %167 = vmatpush.xpose.msra.mxu0 0.0
    %168 = vmatpush.xpose.msra.mxu0 %v151
    %169 = vmatmul.f32.gmra.mxu0 %v149
    %v170 = vpop.f32.mrf.mxu0
    %v171 = vadd.f32 0.0, %v170
    %172 = vdwg.mxu0
    %173 = vrot.lane.b32.xlu0 %v115, 96
    %v174 = vpop.permute.xlu0 %173
    %v176 = vsel %vm147, %v138, 0
    %v178 = vsel %vm147, %v174, 0
    %180 = vmatpush.xpose.msra.mxu0 0.0
    %181 = vmatpush.xpose.msra.mxu0 0.0
    %182 = vmatpush.xpose.msra.mxu0 0.0
    %183 = vmatpush.xpose.msra.mxu0 0.0
    %184 = vmatpush.xpose.msra.mxu0 0.0
    %185 = vmatpush.xpose.msra.mxu0 0.0
    %186 = vmatpush.xpose.msra.mxu0 0.0
    %187 = vmatpush.xpose.msra.mxu0 0.0
    %188 = vmatpush.xpose.msra.mxu0 0.0
    %189 = vmatpush.xpose.msra.mxu0 0.0
    %190 = vmatpush.xpose.msra.mxu0 0.0
    %191 = vmatpush.xpose.msra.mxu0 0.0
    %192 = vmatpush.xpose.msra.mxu0 0.0
    %193 = vmatpush.xpose.msra.mxu0 0.0
    %194 = vmatpush.xpose.msra.mxu0 0.0
    %195 = vmatpush.xpose.msra.mxu0 %v178
    %196 = vmatmul.f32.gmra.mxu0 %v176
    %v197 = vpop.f32.mrf.mxu0
    %v198 = vadd.f32 0.0, %v197
    %199 = vdwg.mxu0
    %200 = vrot.lane.b32.xlu0 %v120, 96
    %v201 = vpop.permute.xlu0 %200
    %v203 = vsel %vm147, %v139, 0
    %v205 = vsel %vm147, %v201, 0
    %207 = vmatpush.xpose.msra.mxu0 0.0
    %208 = vmatpush.xpose.msra.mxu0 0.0
    %209 = vmatpush.xpose.msra.mxu0 0.0
    %210 = vmatpush.xpose.msra.mxu0 0.0
    %211 = vmatpush.xpose.msra.mxu0 0.0
    %212 = vmatpush.xpose.msra.mxu0 0.0
    %213 = vmatpush.xpose.msra.mxu0 0.0
    %214 = vmatpush.xpose.msra.mxu0 0.0
    %215 = vmatpush.xpose.msra.mxu0 0.0
    %216 = vmatpush.xpose.msra.mxu0 0.0
    %217 = vmatpush.xpose.msra.mxu0 0.0
    %218 = vmatpush.xpose.msra.mxu0 0.0
    %219 = vmatpush.xpose.msra.mxu0 0.0
    %220 = vmatpush.xpose.msra.mxu0 0.0
    %221 = vmatpush.xpose.msra.mxu0 0.0
    %222 = vmatpush.xpose.msra.mxu0 %v205
    %223 = vmatmul.f32.gmra.mxu0 %v203
    %v224 = vpop.f32.mrf.mxu0
    %v225 = vadd.f32 0.0, %v224
    %226 = vdwg.mxu0
    %227 = vrot.lane.b32.xlu0 %v122, 96
    %v228 = vpop.permute.xlu0 %227
    %v230 = vsel %vm147, %v140, 0
    %v232 = vsel %vm147, %v228, 0
    %234 = vmatpush.xpose.msra.mxu0 0.0
    %235 = vmatpush.xpose.msra.mxu0 0.0
    %236 = vmatpush.xpose.msra.mxu0 0.0
    %237 = vmatpush.xpose.msra.mxu0 0.0
    %238 = vmatpush.xpose.msra.mxu0 0.0
    %239 = vmatpush.xpose.msra.mxu0 0.0
    %240 = vmatpush.xpose.msra.mxu0 0.0
    %241 = vmatpush.xpose.msra.mxu0 0.0
    %242 = vmatpush.xpose.msra.mxu0 0.0
    %243 = vmatpush.xpose.msra.mxu0 0.0
    %244 = vmatpush.xpose.msra.mxu0 0.0
    %245 = vmatpush.xpose.msra.mxu0 0.0
    %246 = vmatpush.xpose.msra.mxu0 0.0
    %247 = vmatpush.xpose.msra.mxu0 0.0
    %248 = vmatpush.xpose.msra.mxu0 0.0
    %249 = vmatpush.xpose.msra.mxu0 %v232
    %250 = vmatmul.f32.gmra.mxu0 %v230
    %v251 = vpop.f32.mrf.mxu0
    %v252 = vadd.f32 0.0, %v251
    %253 = vdwg.mxu0
    %254 = vrot.lane.b32.xlu0 %v126, 96
    %v255 = vpop.permute.xlu0 %254
    %v257 = vsel %vm147, %v141, 0
    %v259 = vsel %vm147, %v255, 0
    %261 = vmatpush.xpose.msra.mxu0 0.0
    %262 = vmatpush.xpose.msra.mxu0 0.0
    %263 = vmatpush.xpose.msra.mxu0 0.0
    %264 = vmatpush.xpose.msra.mxu0 0.0
    %265 = vmatpush.xpose.msra.mxu0 0.0
    %266 = vmatpush.xpose.msra.mxu0 0.0
    %267 = vmatpush.xpose.msra.mxu0 0.0
    %268 = vmatpush.xpose.msra.mxu0 0.0
    %269 = vmatpush.xpose.msra.mxu0 0.0
    %270 = vmatpush.xpose.msra.mxu0 0.0
    %271 = vmatpush.xpose.msra.mxu0 0.0
    %272 = vmatpush.xpose.msra.mxu0 0.0
    %273 = vmatpush.xpose.msra.mxu0 0.0
    %274 = vmatpush.xpose.msra.mxu0 0.0
    %275 = vmatpush.xpose.msra.mxu0 0.0
    %276 = vmatpush.xpose.msra.mxu0 %v259
    %277 = vmatmul.f32.gmra.mxu0 %v257
    %v278 = vpop.f32.mrf.mxu0
    %v279 = vadd.f32 0.0, %v278
    %280 = vdwg.mxu0
    %281 = vrot.lane.b32.xlu0 %v128, 96
    %v282 = vpop.permute.xlu0 %281
    %v284 = vsel %vm147, %v142, 0
    %v286 = vsel %vm147, %v282, 0
    %288 = vmatpush.xpose.msra.mxu0 0.0
    %289 = vmatpush.xpose.msra.mxu0 0.0
    %290 = vmatpush.xpose.msra.mxu0 0.0
    %291 = vmatpush.xpose.msra.mxu0 0.0
    %292 = vmatpush.xpose.msra.mxu0 0.0
    %293 = vmatpush.xpose.msra.mxu0 0.0
    %294 = vmatpush.xpose.msra.mxu0 0.0
    %295 = vmatpush.xpose.msra.mxu0 0.0
    %296 = vmatpush.xpose.msra.mxu0 0.0
    %297 = vmatpush.xpose.msra.mxu0 0.0
    %298 = vmatpush.xpose.msra.mxu0 0.0
    %299 = vmatpush.xpose.msra.mxu0 0.0
    %300 = vmatpush.xpose.msra.mxu0 0.0
    %301 = vmatpush.xpose.msra.mxu0 0.0
    %302 = vmatpush.xpose.msra.mxu0 0.0
    %303 = vmatpush.xpose.msra.mxu0 %v286
    %304 = vmatmul.f32.gmra.mxu0 %v284
    %v305 = vpop.f32.mrf.mxu0
    %v306 = vadd.f32 0.0, %v305
    %307 = vdwg.mxu0
    %308 = vrot.lane.b32.xlu0 %v132, 96
    %v309 = vpop.permute.xlu0 %308
    %v311 = vsel %vm147, %v143, 0
    %v313 = vsel %vm147, %v309, 0
    %315 = vmatpush.xpose.msra.mxu0 0.0
    %316 = vmatpush.xpose.msra.mxu0 0.0
    %317 = vmatpush.xpose.msra.mxu0 0.0
    %318 = vmatpush.xpose.msra.mxu0 0.0
    %319 = vmatpush.xpose.msra.mxu0 0.0
    %320 = vmatpush.xpose.msra.mxu0 0.0
    %321 = vmatpush.xpose.msra.mxu0 0.0
    %322 = vmatpush.xpose.msra.mxu0 0.0
    %323 = vmatpush.xpose.msra.mxu0 0.0
    %324 = vmatpush.xpose.msra.mxu0 0.0
    %325 = vmatpush.xpose.msra.mxu0 0.0
    %326 = vmatpush.xpose.msra.mxu0 0.0
    %327 = vmatpush.xpose.msra.mxu0 0.0
    %328 = vmatpush.xpose.msra.mxu0 0.0
    %329 = vmatpush.xpose.msra.mxu0 0.0
    %330 = vmatpush.xpose.msra.mxu0 %v313
    %331 = vmatmul.f32.gmra.mxu0 %v311
    %v332 = vpop.f32.mrf.mxu0
    %v333 = vadd.f32 0.0, %v332
    %334 = vdwg.mxu0
    %335 = vrot.lane.b32.xlu0 %v134, 96
    %v336 = vpop.permute.xlu0 %335
    %v338 = vsel %vm147, %v144, 0
    %v340 = vsel %vm147, %v336, 0
    %342 = vmatpush.xpose.msra.mxu0 0.0
    %343 = vmatpush.xpose.msra.mxu0 0.0
    %344 = vmatpush.xpose.msra.mxu0 0.0
    %345 = vmatpush.xpose.msra.mxu0 0.0
    %346 = vmatpush.xpose.msra.mxu0 0.0
    %347 = vmatpush.xpose.msra.mxu0 0.0
    %348 = vmatpush.xpose.msra.mxu0 0.0
    %349 = vmatpush.xpose.msra.mxu0 0.0
    %350 = vmatpush.xpose.msra.mxu0 0.0
    %351 = vmatpush.xpose.msra.mxu0 0.0
    %352 = vmatpush.xpose.msra.mxu0 0.0
    %353 = vmatpush.xpose.msra.mxu0 0.0
    %354 = vmatpush.xpose.msra.mxu0 0.0
    %355 = vmatpush.xpose.msra.mxu0 0.0
    %356 = vmatpush.xpose.msra.mxu0 0.0
    %357 = vmatpush.xpose.msra.mxu0 %v340
    %358 = vmatmul.f32.gmra.mxu0 %v338
    %v359 = vpop.f32.mrf.mxu0
    %v360 = vadd.f32 0.0, %v359
    %361 = vdwg.mxu0
    %v362 = vlaneseq
    %v363 = vshrl.u32 %v362, 7
    %v364 = vlaneseq
    %v365 = vand.u32 %v364, 127
    %vm366 = vcmp.le.s32.totalorder %v365, %v363
    %v367 = vsel %vm366, 1, 0
    %vm368 = vcmp.eq.s32.totalorder %v367, 1
    %v369 = vsel %vm368, %v171, -1e+30
    %v370 = vsel %vm368, %v198, -1e+30
    %v371 = vsel %vm368, %v225, -1e+30
    %v372 = vsel %vm368, %v252, -1e+30
    %v373 = vsel %vm368, %v279, -1e+30
    %v374 = vsel %vm368, %v306, -1e+30
    %v375 = vsel %vm368, %v333, -1e+30
    %v376 = vsel %vm368, %v360, -1e+30
    %v377 = vsel %vm147, %v369, -inf
    %378 = vmax.xlane.f32.xlu0 %v377
    %v379 = vpop.xlane.xlu0 %378
    %v380 = vsel %vm147, %v370, -inf
    %381 = vmax.xlane.f32.xlu0 %v380
    %v382 = vpop.xlane.xlu0 %381
    %v383 = vsel %vm147, %v371, -inf
    %384 = vmax.xlane.f32.xlu0 %v383
    %v385 = vpop.xlane.xlu0 %384
    %v386 = vsel %vm147, %v372, -inf
    %387 = vmax.xlane.f32.xlu0 %v386
    %v388 = vpop.xlane.xlu0 %387
    %v389 = vsel %vm147, %v373, -inf
    %390 = vmax.xlane.f32.xlu0 %v389
    %v391 = vpop.xlane.xlu0 %390
    %v392 = vsel %vm147, %v374, -inf
    %393 = vmax.xlane.f32.xlu0 %v392
    %v394 = vpop.xlane.xlu0 %393
    %v395 = vsel %vm147, %v375, -inf
    %396 = vmax.xlane.f32.xlu0 %v395
    %v397 = vpop.xlane.xlu0 %396
    %v398 = vsel %vm147, %v376, -inf
    %399 = vmax.xlane.f32.xlu0 %v398
    %v400 = vpop.xlane.xlu0 %399
    %v401 = vsub.f32 %v369, %v379
    %v402 = vsub.f32 %v370, %v382
    %v403 = vsub.f32 %v371, %v385
    %v404 = vsub.f32 %v372, %v388
    %v405 = vsub.f32 %v373, %v391
    %v406 = vsub.f32 %v374, %v394
    %v407 = vsub.f32 %v375, %v397
    %v408 = vsub.f32 %v376, %v400
    %v409 = vmul.f32 %v401, 1.442695
    %v410 = vpow.pop %v409
    %v411 = vmul.f32 %v402, 1.442695
    %v412 = vpow.pop %v411
    %v413 = vmul.f32 %v403, 1.442695
    %v414 = vpow.pop %v413
    %v415 = vmul.f32 %v404, 1.442695
    %v416 = vpow.pop %v415
    %v417 = vmul.f32 %v405, 1.442695
    %v418 = vpow.pop %v417
    %v419 = vmul.f32 %v406, 1.442695
    %v420 = vpow.pop %v419
    %v421 = vmul.f32 %v407, 1.442695
    %v422 = vpow.pop %v421
    %v423 = vmul.f32 %v408, 1.442695
    %v424 = vpow.pop %v423
    %v425 = vsel %vm147, %v410, 0.0
    %426 = vadd.xlane.f32.xlu0 %v425
    %v427 = vpop.xlane.xlu0 %426
    %v428 = vsel %vm147, %v412, 0.0
    %429 = vadd.xlane.f32.xlu0 %v428
    %v430 = vpop.xlane.xlu0 %429
    %v431 = vsel %vm147, %v414, 0.0
    %432 = vadd.xlane.f32.xlu0 %v431
    %v433 = vpop.xlane.xlu0 %432
    %v434 = vsel %vm147, %v416, 0.0
    %435 = vadd.xlane.f32.xlu0 %v434
    %v436 = vpop.xlane.xlu0 %435
    %v437 = vsel %vm147, %v418, 0.0
    %438 = vadd.xlane.f32.xlu0 %v437
    %v439 = vpop.xlane.xlu0 %438
    %v440 = vsel %vm147, %v420, 0.0
    %441 = vadd.xlane.f32.xlu0 %v440
    %v442 = vpop.xlane.xlu0 %441
    %v443 = vsel %vm147, %v422, 0.0
    %444 = vadd.xlane.f32.xlu0 %v443
    %v445 = vpop.xlane.xlu0 %444
    %v446 = vsel %vm147, %v424, 0.0
    %447 = vadd.xlane.f32.xlu0 %v446
    %v448 = vpop.xlane.xlu0 %447
    %v449 = vrcp.pop %v427
    %v450 = vmul.f32 %v427, %v449
    %v451 = vsub.f32 1.0, %v450
    %v452 = vmul.f32 %v449, %v451
    %v453 = vadd.f32 %v449, %v452
    %vm454 = vweird.f32 %v427
    %vm455 = vweird.f32 %v449
    %vm456 = vmor %vm454, %vm455
    %v457 = vsel %vm456, %v449, %v453
    %v458 = vand.u32 2147483647, %v427
    %vm459 = vcmp.eq.f32.partialorder %v458, 8.507059e+37
    %v460 = vand.u32 %v427, 2147483648
    %v461 = vor.u32 1.1754944e-38, %v460
    %v462 = vsel %vm459, %v461, %v457
    %v463 = vmul.f32 %v410, %v462
    %v464 = vrcp.pop %v430
    %v465 = vmul.f32 %v430, %v464
    %v466 = vsub.f32 1.0, %v465
    %v467 = vmul.f32 %v464, %v466
    %v468 = vadd.f32 %v464, %v467
    %vm469 = vweird.f32 %v430
    %vm470 = vweird.f32 %v464
    %vm471 = vmor %vm469, %vm470
    %v472 = vsel %vm471, %v464, %v468
    %v473 = vand.u32 2147483647, %v430
    %vm474 = vcmp.eq.f32.partialorder %v473, 8.507059e+37
    %v475 = vand.u32 %v430, 2147483648
    %v476 = vor.u32 1.1754944e-38, %v475
    %v477 = vsel %vm474, %v476, %v472
    %v478 = vmul.f32 %v412, %v477
    %v479 = vrcp.pop %v433
    %v480 = vmul.f32 %v433, %v479
    %v481 = vsub.f32 1.0, %v480
    %v482 = vmul.f32 %v479, %v481
    %v483 = vadd.f32 %v479, %v482
    %vm484 = vweird.f32 %v433
    %vm485 = vweird.f32 %v479
    %vm486 = vmor %vm484, %vm485
    %v487 = vsel %vm486, %v479, %v483
    %v488 = vand.u32 2147483647, %v433
    %vm489 = vcmp.eq.f32.partialorder %v488, 8.507059e+37
    %v490 = vand.u32 %v433, 2147483648
    %v491 = vor.u32 1.1754944e-38, %v490
    %v492 = vsel %vm489, %v491, %v487
    %v493 = vmul.f32 %v414, %v492
    %v494 = vrcp.pop %v436
    %v495 = vmul.f32 %v436, %v494
    %v496 = vsub.f32 1.0, %v495
    %v497 = vmul.f32 %v494, %v496
    %v498 = vadd.f32 %v494, %v497
    %vm499 = vweird.f32 %v436
    %vm500 = vweird.f32 %v494
    %vm501 = vmor %vm499, %vm500
    %v502 = vsel %vm501, %v494, %v498
    %v503 = vand.u32 2147483647, %v436
    %vm504 = vcmp.eq.f32.partialorder %v503, 8.507059e+37
    %v505 = vand.u32 %v436, 2147483648
    %v506 = vor.u32 1.1754944e-38, %v505
    %v507 = vsel %vm504, %v506, %v502
    %v508 = vmul.f32 %v416, %v507
    %v509 = vrcp.pop %v439
    %v510 = vmul.f32 %v439, %v509
    %v511 = vsub.f32 1.0, %v510
    %v512 = vmul.f32 %v509, %v511
    %v513 = vadd.f32 %v509, %v512
    %vm514 = vweird.f32 %v439
    %vm515 = vweird.f32 %v509
    %vm516 = vmor %vm514, %vm515
    %v517 = vsel %vm516, %v509, %v513
    %v518 = vand.u32 2147483647, %v439
    %vm519 = vcmp.eq.f32.partialorder %v518, 8.507059e+37
    %v520 = vand.u32 %v439, 2147483648
    %v521 = vor.u32 1.1754944e-38, %v520
    %v522 = vsel %vm519, %v521, %v517
    %v523 = vmul.f32 %v418, %v522
    %v524 = vrcp.pop %v442
    %v525 = vmul.f32 %v442, %v524
    %v526 = vsub.f32 1.0, %v525
    %v527 = vmul.f32 %v524, %v526
    %v528 = vadd.f32 %v524, %v527
    %vm529 = vweird.f32 %v442
    %vm530 = vweird.f32 %v524
    %vm531 = vmor %vm529, %vm530
    %v532 = vsel %vm531, %v524, %v528
    %v533 = vand.u32 2147483647, %v442
    %vm534 = vcmp.eq.f32.partialorder %v533, 8.507059e+37
    %v535 = vand.u32 %v442, 2147483648
    %v536 = vor.u32 1.1754944e-38, %v535
    %v537 = vsel %vm534, %v536, %v532
    %v538 = vmul.f32 %v420, %v537
    %v539 = vrcp.pop %v445
    %v540 = vmul.f32 %v445, %v539
    %v541 = vsub.f32 1.0, %v540
    %v542 = vmul.f32 %v539, %v541
    %v543 = vadd.f32 %v539, %v542
    %vm544 = vweird.f32 %v445
    %vm545 = vweird.f32 %v539
    %vm546 = vmor %vm544, %vm545
    %v547 = vsel %vm546, %v539, %v543
    %v548 = vand.u32 2147483647, %v445
    %vm549 = vcmp.eq.f32.partialorder %v548, 8.507059e+37
    %v550 = vand.u32 %v445, 2147483648
    %v551 = vor.u32 1.1754944e-38, %v550
    %v552 = vsel %vm549, %v551, %v547
    %v553 = vmul.f32 %v422, %v552
    %v554 = vrcp.pop %v448
    %v555 = vmul.f32 %v448, %v554
    %v556 = vsub.f32 1.0, %v555
    %v557 = vmul.f32 %v554, %v556
    %v558 = vadd.f32 %v554, %v557
    %vm559 = vweird.f32 %v448
    %vm560 = vweird.f32 %v554
    %vm561 = vmor %vm559, %vm560
    %v562 = vsel %vm561, %v554, %v558
    %v563 = vand.u32 2147483647, %v448
    %vm564 = vcmp.eq.f32.partialorder %v563, 8.507059e+37
    %v565 = vand.u32 %v448, 2147483648
    %v566 = vor.u32 1.1754944e-38, %v565
    %v567 = vsel %vm564, %v566, %v562
    %v568 = vmul.f32 %v424, %v567
    %569 = vrot.lane.b32.xlu0 %v112, 64
    %v570 = vpop.permute.xlu0 %569
    %v573 = vsel %vm147, %v463, 0
    %575 = vmatpush.msra.mxu0 0.0
    %576 = vmatpush.msra.mxu0 0.0
    %577 = vmatpush.msra.mxu0 0.0
    %578 = vmatpush.msra.mxu0 0.0
    %579 = vmatpush.msra.mxu0 0.0
    %580 = vmatpush.msra.mxu0 0.0
    %581 = vmatpush.msra.mxu0 0.0
    %582 = vmatpush.msra.mxu0 0.0
    %583 = vmatpush.msra.mxu0 0.0
    %584 = vmatpush.msra.mxu0 0.0
    %585 = vmatpush.msra.mxu0 0.0
    %586 = vmatpush.msra.mxu0 0.0
    %587 = vmatpush.msra.mxu0 0.0
    %588 = vmatpush.msra.mxu0 0.0
    %589 = vmatpush.msra.mxu0 0.0
    %590 = vmatpush.msra.mxu0 %v570
    %591 = vmatmul.f32.gmra.mxu0 %v573
    %v592 = vpop.f32.mrf.mxu0
    %v593 = vadd.f32 0.0, %v592
    %594 = vdwg.mxu0
    %595 = vrot.lane.b32.xlu0 %v115, 64
    %v596 = vpop.permute.xlu0 %595
    %v599 = vsel %vm147, %v478, 0
    %601 = vmatpush.msra.mxu0 0.0
    %602 = vmatpush.msra.mxu0 0.0
    %603 = vmatpush.msra.mxu0 0.0
    %604 = vmatpush.msra.mxu0 0.0
    %605 = vmatpush.msra.mxu0 0.0
    %606 = vmatpush.msra.mxu0 0.0
    %607 = vmatpush.msra.mxu0 0.0
    %608 = vmatpush.msra.mxu0 0.0
    %609 = vmatpush.msra.mxu0 0.0
    %610 = vmatpush.msra.mxu0 0.0
    %611 = vmatpush.msra.mxu0 0.0
    %612 = vmatpush.msra.mxu0 0.0
    %613 = vmatpush.msra.mxu0 0.0
    %614 = vmatpush.msra.mxu0 0.0
    %615 = vmatpush.msra.mxu0 0.0
    %616 = vmatpush.msra.mxu0 %v596
    %617 = vmatmul.f32.gmra.mxu0 %v599
    %v618 = vpop.f32.mrf.mxu0
    %v619 = vadd.f32 0.0, %v618
    %620 = vdwg.mxu0
    %621 = vrot.lane.b32.xlu0 %v120, 64
    %v622 = vpop.permute.xlu0 %621
    %v625 = vsel %vm147, %v493, 0
    %627 = vmatpush.msra.mxu0 0.0
    %628 = vmatpush.msra.mxu0 0.0
    %629 = vmatpush.msra.mxu0 0.0
    %630 = vmatpush.msra.mxu0 0.0
    %631 = vmatpush.msra.mxu0 0.0
    %632 = vmatpush.msra.mxu0 0.0
    %633 = vmatpush.msra.mxu0 0.0
    %634 = vmatpush.msra.mxu0 0.0
    %635 = vmatpush.msra.mxu0 0.0
    %636 = vmatpush.msra.mxu0 0.0
    %637 = vmatpush.msra.mxu0 0.0
    %638 = vmatpush.msra.mxu0 0.0
    %639 = vmatpush.msra.mxu0 0.0
    %640 = vmatpush.msra.mxu0 0.0
    %641 = vmatpush.msra.mxu0 0.0
    %642 = vmatpush.msra.mxu0 %v622
    %643 = vmatmul.f32.gmra.mxu0 %v625
    %v644 = vpop.f32.mrf.mxu0
    %v645 = vadd.f32 0.0, %v644
    %646 = vdwg.mxu0
    %647 = vrot.lane.b32.xlu0 %v122, 64
    %v648 = vpop.permute.xlu0 %647
    %v651 = vsel %vm147, %v508, 0
    %653 = vmatpush.msra.mxu0 0.0
    %654 = vmatpush.msra.mxu0 0.0
    %655 = vmatpush.msra.mxu0 0.0
    %656 = vmatpush.msra.mxu0 0.0
    %657 = vmatpush.msra.mxu0 0.0
    %658 = vmatpush.msra.mxu0 0.0
    %659 = vmatpush.msra.mxu0 0.0
    %660 = vmatpush.msra.mxu0 0.0
    %661 = vmatpush.msra.mxu0 0.0
    %662 = vmatpush.msra.mxu0 0.0
    %663 = vmatpush.msra.mxu0 0.0
    %664 = vmatpush.msra.mxu0 0.0
    %665 = vmatpush.msra.mxu0 0.0
    %666 = vmatpush.msra.mxu0 0.0
    %667 = vmatpush.msra.mxu0 0.0
    %668 = vmatpush.msra.mxu0 %v648
    %669 = vmatmul.f32.gmra.mxu0 %v651
    %v670 = vpop.f32.mrf.mxu0
    %v671 = vadd.f32 0.0, %v670
    %672 = vdwg.mxu0
    %673 = vrot.lane.b32.xlu0 %v126, 64
    %v674 = vpop.permute.xlu0 %673
    %v677 = vsel %vm147, %v523, 0
    %679 = vmatpush.msra.mxu0 0.0
    %680 = vmatpush.msra.mxu0 0.0
    %681 = vmatpush.msra.mxu0 0.0
    %682 = vmatpush.msra.mxu0 0.0
    %683 = vmatpush.msra.mxu0 0.0
    %684 = vmatpush.msra.mxu0 0.0
    %685 = vmatpush.msra.mxu0 0.0
    %686 = vmatpush.msra.mxu0 0.0
    %687 = vmatpush.msra.mxu0 0.0
    %688 = vmatpush.msra.mxu0 0.0
    %689 = vmatpush.msra.mxu0 0.0
    %690 = vmatpush.msra.mxu0 0.0
    %691 = vmatpush.msra.mxu0 0.0
    %692 = vmatpush.msra.mxu0 0.0
    %693 = vmatpush.msra.mxu0 0.0
    %694 = vmatpush.msra.mxu0 %v674
    %695 = vmatmul.f32.gmra.mxu0 %v677
    %v696 = vpop.f32.mrf.mxu0
    %v697 = vadd.f32 0.0, %v696
    %698 = vdwg.mxu0
    %699 = vrot.lane.b32.xlu0 %v128, 64
    %v700 = vpop.permute.xlu0 %699
    %v703 = vsel %vm147, %v538, 0
    %705 = vmatpush.msra.mxu0 0.0
    %706 = vmatpush.msra.mxu0 0.0
    %707 = vmatpush.msra.mxu0 0.0
    %708 = vmatpush.msra.mxu0 0.0
    %709 = vmatpush.msra.mxu0 0.0
    %710 = vmatpush.msra.mxu0 0.0
    %711 = vmatpush.msra.mxu0 0.0
    %712 = vmatpush.msra.mxu0 0.0
    %713 = vmatpush.msra.mxu0 0.0
    %714 = vmatpush.msra.mxu0 0.0
    %715 = vmatpush.msra.mxu0 0.0
    %716 = vmatpush.msra.mxu0 0.0
    %717 = vmatpush.msra.mxu0 0.0
    %718 = vmatpush.msra.mxu0 0.0
    %719 = vmatpush.msra.mxu0 0.0
    %720 = vmatpush.msra.mxu0 %v700
    %721 = vmatmul.f32.gmra.mxu0 %v703
    %v722 = vpop.f32.mrf.mxu0
    %v723 = vadd.f32 0.0, %v722
    %724 = vdwg.mxu0
    %725 = vrot.lane.b32.xlu0 %v132, 64
    %v726 = vpop.permute.xlu0 %725
    %v729 = vsel %vm147, %v553, 0
    %731 = vmatpush.msra.mxu0 0.0
    %732 = vmatpush.msra.mxu0 0.0
    %733 = vmatpush.msra.mxu0 0.0
    %734 = vmatpush.msra.mxu0 0.0
    %735 = vmatpush.msra.mxu0 0.0
    %736 = vmatpush.msra.mxu0 0.0
    %737 = vmatpush.msra.mxu0 0.0
    %738 = vmatpush.msra.mxu0 0.0
    %739 = vmatpush.msra.mxu0 0.0
    %740 = vmatpush.msra.mxu0 0.0
    %741 = vmatpush.msra.mxu0 0.0
    %742 = vmatpush.msra.mxu0 0.0
    %743 = vmatpush.msra.mxu0 0.0
    %744 = vmatpush.msra.mxu0 0.0
    %745 = vmatpush.msra.mxu0 0.0
    %746 = vmatpush.msra.mxu0 %v726
    %747 = vmatmul.f32.gmra.mxu0 %v729
    %v748 = vpop.f32.mrf.mxu0
    %v749 = vadd.f32 0.0, %v748
    %750 = vdwg.mxu0
    %751 = vrot.lane.b32.xlu0 %v134, 64
    %v752 = vpop.permute.xlu0 %751
    %v755 = vsel %vm147, %v568, 0
    %757 = vmatpush.msra.mxu0 0.0
    %758 = vmatpush.msra.mxu0 0.0
    %759 = vmatpush.msra.mxu0 0.0
    %760 = vmatpush.msra.mxu0 0.0
    %761 = vmatpush.msra.mxu0 0.0
    %762 = vmatpush.msra.mxu0 0.0
    %763 = vmatpush.msra.mxu0 0.0
    %764 = vmatpush.msra.mxu0 0.0
    %765 = vmatpush.msra.mxu0 0.0
    %766 = vmatpush.msra.mxu0 0.0
    %767 = vmatpush.msra.mxu0 0.0
    %768 = vmatpush.msra.mxu0 0.0
    %769 = vmatpush.msra.mxu0 0.0
    %770 = vmatpush.msra.mxu0 0.0
    %771 = vmatpush.msra.mxu0 0.0
    %772 = vmatpush.msra.mxu0 %v752
    %773 = vmatmul.f32.gmra.mxu0 %v755
    %v774 = vpop.f32.mrf.mxu0
    %v775 = vadd.f32 0.0, %v774
    %776 = vdwg.mxu0
    %779 = vrot.lane.b32.xlu0 %v645, 8
    %v780 = vpop.permute.xlu0 %779
    %781 = vrot.lane.b32.xlu0 %v671, 8
    %v782 = vpop.permute.xlu0 %781
    %787 = vrot.lane.b32.xlu0 %v697, 16
    %v788 = vpop.permute.xlu0 %787
    %789 = vrot.lane.b32.xlu0 %v723, 16
    %v790 = vpop.permute.xlu0 %789
    %795 = vrot.lane.b32.xlu0 %v749, 24
    %v796 = vpop.permute.xlu0 %795
    %797 = vrot.lane.b32.xlu0 %v775, 24
    %v798 = vpop.permute.xlu0 %797
    %v801 = vsel %vm147, %v593, %v780
    %v802 = vsel %vm147, %v619, %v782
    %vm803 = vcmask 130048
    %v804 = vsel %vm803, %v801, %v788
    %v805 = vsel %vm803, %v802, %v790
    %vm806 = vcmask 195584
    %v807 = vsel %vm806, %v804, %v796
    %v808 = vsel %vm806, %v805, %v798
    %v809 = vld [vmem:[#allocation7] sm:$0xff]
    %v810 = vld [vmem:[#allocation7 + $0x8] sm:$0xff]
    %v811 = vld [vmem:[#allocation7 + $0x10] sm:$0xff]
    %v812 = vld [vmem:[#allocation7 + $0x18] sm:$0xff]
    %v813 = vld [vmem:[#allocation8 + $0x1] sm:$0x1]
    %v814 = vld [vmem:[#allocation8 + $0x2] sm:$0x1]
    %v815 = vld [vmem:[#allocation8 + $0x3] sm:$0x1]
    %v816 = vperm.slane %v813, 0
    %v818 = vsel %vm87, %v807, 0
    %v821 = vsel %vm87, %v808, 0
    %823 = vmatpush.msra.mxu0 0.0
    %824 = vmatpush.msra.mxu0 0.0
    %825 = vmatpush.msra.mxu0 0.0
    %826 = vmatpush.msra.mxu0 0.0
    %827 = vmatpush.msra.mxu0 0.0
    %828 = vmatpush.msra.mxu0 0.0
    %829 = vmatpush.msra.mxu0 0.0
    %830 = vmatpush.msra.mxu0 0.0
    %831 = vmatpush.msra.mxu0 0.0
    %832 = vmatpush.msra.mxu0 0.0
    %833 = vmatpush.msra.mxu0 0.0
    %834 = vmatpush.msra.mxu0 0.0
    %835 = vmatpush.msra.mxu0 %v812
    %836 = vmatpush.msra.mxu0 %v811
    %837 = vmatpush.msra.mxu0 %v810
    %838 = vmatpush.msra.mxu0 %v809
    %839 = vmatmul.f32.gmra.mxu0 %v818
    %v840 = vpop.f32.mrf.mxu0
    %v841 = vadd.f32 %v816, %v840
    %842 = vmatmul.f32.gmra.mxu0 %v821
    %v843 = vpop.f32.mrf.mxu0
    %v844 = vadd.f32 %v816, %v843
    %845 = vdwg.mxu0
    %v846 = vadd.f32 %v841, %v79
    %v847 = vadd.f32 %v844, %v80
    %v848 = vsel %vm87, %v846, 0.0
    %849 = vadd.xlane.f32.xlu0 %v848
    %v850 = vpop.xlane.xlu0 %849
    %v851 = vsel %vm87, %v847, 0.0
    %852 = vadd.xlane.f32.xlu0 %v851
    %v853 = vpop.xlane.xlu0 %852
    %v854 = vrcp.pop 32.0
    %v855 = vmul.f32 32.0, %v854
    %v856 = vsub.f32 1.0, %v855
    %v857 = vmul.f32 %v854, %v856
    %v858 = vadd.f32 %v854, %v857
    %vm859 = vweird.f32 %v854
    %v860 = vsel %vm859, %v854, %v858
    %v861 = vmul.f32 %v850, %v860
    %v862 = vmul.f32 %v853, %v860
    %v863 = vsub.f32 %v846, %v861
    %v864 = vsub.f32 %v847, %v862
    %v865 = vmul.f32 %v863, %v863
    %v866 = vmul.f32 %v864, %v864
    %v867 = vsel %vm87, %v865, 0.0
    %868 = vadd.xlane.f32.xlu0 %v867
    %v869 = vpop.xlane.xlu0 %868
    %v870 = vsel %vm87, %v866, 0.0
    %871 = vadd.xlane.f32.xlu0 %v870
    %v872 = vpop.xlane.xlu0 %871
    %v873 = vmul.f32 %v869, %v860
    %v874 = vmul.f32 %v872, %v860
    %v875 = vadd.f32 %v873, 1e-05
    %v876 = vadd.f32 %v874, 1e-05
    %v877 = vrsqrt.pop %v875
    %v878 = vmul.f32 %v877, %v875
    %v879 = vmul.f32 %v878, %v877
    %v880 = vmul.f32 0.5, %v879
    %v881 = vsub.f32 1.5, %v880
    %v882 = vmul.f32 %v877, %v881
    %vm883 = vweird.f32 %v875
    %vm884 = vweird.f32 %v877
    %vm885 = vmor %vm883, %vm884
    %v886 = vsel %vm885, %v877, %v882
    %v887 = vrsqrt.pop %v876
    %v888 = vmul.f32 %v887, %v876
    %v889 = vmul.f32 %v888, %v887
    %v890 = vmul.f32 0.5, %v889
    %v891 = vsub.f32 1.5, %v890
    %v892 = vmul.f32 %v887, %v891
    %vm893 = vweird.f32 %v876
    %vm894 = vweird.f32 %v887
    %vm895 = vmor %vm893, %vm894
    %v896 = vsel %vm895, %v887, %v892
    %v897 = vmul.f32 %v863, %v886
    %v898 = vmul.f32 %v864, %v896
    %v899 = vperm.slane %v814, 0
    %v900 = vmul.f32 %v897, %v899
    %v901 = vmul.f32 %v898, %v899
    %v902 = vperm.slane %v815, 0
    %v903 = vadd.f32 %v900, %v902
    %v904 = vadd.f32 %v901, %v902
    %905 = vst.msk [vmem:[#allocation10] sm:$0xff] %vm87, %v903
    %906 = vst.msk [vmem:[#allocation10 + $0x8] sm:$0xff] %vm87, %v904
    // Predicated region
    $region34: #{tpu_custom_call.1} parent=1 // pred_check
      _
    $region35: #{tpu_custom_call.1} parent=1 // pred_check_branch
      %908 = sbr.rel (0) target = $region37
    $region36: #{tpu_custom_call.1} parent=1 // pred_region
      %910 = vsyncadd [#allocation4], 0
      %s911 = sshll.u32 [#allocation10], 4
      %s912 = int_to_ptr.vmem [resolvable:$true] %s911
      %s913 = sshll.u32 %s4, 4
      %s914 = int_to_ptr.hbm [resolvable:$true] %s913
      %919 = dma.vmem_to_hbm [thread:$0]  %s912, 256, %s914, [#allocation4], 128, 128, 8
    $region37: #{tpu_custom_call.1} parent=1 // pred_fallthru
      _
    // Predicated region
    $region38: #{tpu_custom_call.1} parent=1 // pred_check
      _
    $region39: #{tpu_custom_call.1} parent=1 // pred_check_branch
      %921 = sbr.rel (0) target = $region41
    $region40: #{tpu_custom_call.1} parent=1 // pred_region
      %923 = dma.done [#allocation4], 256
    $region41: #{tpu_custom_call.1} parent=1 // pred_fallthru
      _
    %924 = vsyncpa [#allocation3], 1
    %925 = vsyncpa [#allocation6], 1
    %926 = vsyncpa [#allocation9], 1
    %927 = vsyncpa [#allocation4], 1

</llo_original>
